<compile_context>
chip_gen: v7x
topology: tpu7x:2x2x1
jax: 0.10.0
libtpu: 0.0.40
codegen_flags: <defaults>
</compile_context>

<pallas_src>
import jax
import jax.numpy as jnp
from jax import lax
from jax.experimental import pallas as pl
from jax.experimental.pallas import tpu as pltpu


# ---------------------------------------------------------------------------
# Pallas kernels (all MXU work lives here; operands bf16, accumulation f32).
# ---------------------------------------------------------------------------
def project_kernel(x_ref, w_ref, o_ref):
    # XW1 = X @ W1  (per row tile of X)
    o_ref[...] = jnp.dot(
        x_ref[...], w_ref[...], preferred_element_type=jnp.float32
    ).astype(o_ref.dtype)


def agg_relu_project_kernel(a_ref, xw_ref, b_ref, w_ref, o_ref):
    # HW2_tile = relu(A_tile @ XW1 + b1) @ W2
    h = jnp.dot(a_ref[...], xw_ref[...], preferred_element_type=jnp.float32)
    h = jnp.maximum(h + b_ref[...], 0.0)
    o_ref[...] = jnp.dot(
        h.astype(w_ref.dtype), w_ref[...], preferred_element_type=jnp.float32
    ).astype(o_ref.dtype)


def agg_decode_kernel(a_ref, hw_ref, b2_ref, wd_ref, bd_ref, o_ref):
    # Y_tile = (A_tile @ HW2 + b2) @ Wd + bd
    z = jnp.dot(a_ref[...], hw_ref[...], preferred_element_type=jnp.float32)
    z = z + b2_ref[...]
    y = jnp.dot(
        z.astype(wd_ref.dtype), wd_ref[...], preferred_element_type=jnp.float32
    ) + bd_ref[...]
    o_ref[...] = y


# ---------------------------------------------------------------------------
# Plain-JAX glue.
# ---------------------------------------------------------------------------
def _round_up(x, m):
    return ((x + m - 1) // m) * m


def _pad2(a, rows, cols):
    return jnp.pad(a, ((0, rows - a.shape[0]), (0, cols - a.shape[1])))


def build_normalized_adjacency(edge_index, n):
    """Dense PyG gcn_norm: add_remaining_self_loops, then D^-1/2 (A+I) D^-1/2.

    Precompute once per (static) graph; it is an input to the jitted forward.
    """
    src = edge_index[0]
    dst = edge_index[1]
    a_hat = jnp.zeros((n, n), jnp.float32).at[dst, src].add(1.0)
    # add_remaining_self_loops: only add a self loop where none exists
    # (avoids double-counting explicit self loops, matching PyG).
    idx = jnp.arange(n)
    diag = a_hat[idx, idx]
    a_hat = a_hat.at[idx, idx].add(jnp.where(diag > 0, 0.0, 1.0))
    deg = a_hat.sum(axis=1)                       # in-degree incl. self loops
    dinv = jnp.where(deg > 0, lax.rsqrt(deg), 0.0)
    return a_hat * dinv[:, None] * dinv[None, :]


def gnn_autoencoder_apply(x, a_norm, params, *, block_rows=256):
    """x: [N, in_ch] f32, a_norm: [N, N] f32 (from build_normalized_adjacency)."""
    n, in_ch = x.shape
    w1, b1, w2, b2, wd, bd = params
    hid_ch = w1.shape[1]
    out_ch = w2.shape[1]

    # Lane-dense channel padding + node-dim tiling.
    in_pad = _round_up(in_ch, 128)
    hid_pad = _round_up(hid_ch, 128)
    out_pad = _round_up(out_ch, 128)
    tm = min(block_rows, _round_up(n, 128))       # row-tile of A / outputs
    n_pad = _round_up(n, tm)
    grid = (n_pad // tm,)

    # bf16 MXU operands (halves VMEM/HBM traffic of the O(N^2) A term),
    # f32 biases for the f32 bias-add / ReLU path inside the kernels.
    a_bf = _pad2(a_norm, n_pad, n_pad).astype(jnp.bfloat16)
    x_bf = _pad2(x, n_pad, in_pad).astype(jnp.bfloat16)
    w1_bf = _pad2(w1, in_pad, hid_pad).astype(jnp.bfloat16)
    w2_bf = _pad2(w2, hid_pad, out_pad).astype(jnp.bfloat16)
    wd_bf = _pad2(wd, out_pad, in_pad).astype(jnp.bfloat16)
    b1_p = _pad2(b1.reshape(1, -1), 1, hid_pad).astype(jnp.float32)
    b2_p = _pad2(b2.reshape(1, -1), 1, out_pad).astype(jnp.float32)
    bd_p = _pad2(bd.reshape(1, -1), 1, in_pad).astype(jnp.float32)

    cparams = pltpu.CompilerParams(
        dimension_semantics=("parallel",),         # shards across v7x's 2 TCs
        vmem_limit_bytes=48 * 1024 * 1024,         # explicit, v7x-safe (<64 MiB)
    )

    def row_spec(cols):
        return pl.BlockSpec((tm, cols), lambda i: (i, 0))

    def full_spec(shape):
        return pl.BlockSpec(shape, lambda i: (0, 0))

    # Pass 1: XW1 = X @ W1   (row-tiled, lane-dense bf16 output)
    xw1 = pl.pallas_call(
        project_kernel,
        out_shape=jax.ShapeDtypeStruct((n_pad, hid_pad), jnp.bfloat16),
        grid=grid,
        in_specs=[row_spec(in_pad), full_spec((in_pad, hid_pad))],
        out_specs=row_spec(hid_pad),
        compiler_params=cparams,
        cost_estimate=pl.CostEstimate(
            flops=2 * n_pad * in_pad * hid_pad,
            transcendentals=0,
            bytes_accessed=2 * (n_pad * in_pad + in_pad * hid_pad
                                + n_pad * hid_pad)),
    )(x_bf, w1_bf)

    # Pass 2: HW2_tile = relu(A_tile @ XW1 + b1) @ W2
    hw2 = pl.pallas_call(
        agg_relu_project_kernel,
        out_shape=jax.ShapeDtypeStruct((n_pad, out_pad), jnp.bfloat16),
        grid=grid,
        in_specs=[row_spec(n_pad),
                  full_spec((n_pad, hid_pad)),
                  full_spec((1, hid_pad)),
                  full_spec((hid_pad, out_pad))],
        out_specs=row_spec(out_pad),
        compiler_params=cparams,
        cost_estimate=pl.CostEstimate(
            flops=2 * n_pad * n_pad * hid_pad + 2 * n_pad * hid_pad * out_pad,
            transcendentals=0,
            bytes_accessed=2 * (n_pad * n_pad + n_pad * hid_pad
                                + hid_pad * out_pad + n_pad * out_pad)
                           + 4 * hid_pad),
    )(a_bf, xw1, b1_p, w2_bf)

    # Pass 3: Y_tile = (A_tile @ HW2 + b2) @ Wd + bd   (f32, lane-dense)
    y_pad = pl.pallas_call(
        agg_decode_kernel,
        out_shape=jax.ShapeDtypeStruct((n_pad, in_pad), jnp.float32),
        grid=grid,
        in_specs=[row_spec(n_pad),
                  full_spec((n_pad, out_pad)),
                  full_spec((1, out_pad)),
                  full_spec((out_pad, in_pad)),
                  full_spec((1, in_pad))],
        out_specs=row_spec(in_pad),
        compiler_params=cparams,
        cost_estimate=pl.CostEstimate(
            flops=2 * n_pad * n_pad * out_pad + 2 * n_pad * out_pad * in_pad,
            transcendentals=0,
            bytes_accessed=2 * (n_pad * n_pad + n_pad * out_pad
                                + out_pad * in_pad)
                           + 4 * (out_pad + in_pad + n_pad * in_pad)),
    )(a_bf, hw2, b2_p, wd_bf, bd_p)

    return y_pad[:n, :in_ch]


def gnn_autoencoder_forward(x, edge_index, params, *, block_rows=256):
    a_norm = build_normalized_adjacency(edge_index, x.shape[0])
    return gnn_autoencoder_apply(x, a_norm, params, block_rows=block_rows)


def reference_forward(x, a_norm, params):
    """Plain-JAX f32 reference of the same forward pass."""
    w1, b1, w2, b2, wd, bd = params
    h = jnp.maximum(a_norm @ (x @ w1) + b1, 0.0)
    z = a_norm @ (h @ w2) + b2
    return z @ wd + bd


def init_params(key, in_channels, hidden_channels, out_channels):
    k1, k2, k3 = jax.random.split(key, 3)
    # GCNConv weights stored [in, out]; decoder Linear stored transposed [out, in].
    w1 = jax.random.normal(k1, (in_channels, hidden_channels), jnp.float32) * 0.1
    b1 = jnp.zeros((hidden_channels,), jnp.float32)
    w2 = jax.random.normal(k2, (hidden_channels, out_channels), jnp.float32) * 0.1
    b2 = jnp.zeros((out_channels,), jnp.float32)
    wd = jax.random.normal(k3, (out_channels, in_channels), jnp.float32) * 0.1
    bd = jnp.zeros((in_channels,), jnp.float32)
    return (w1, b1, w2, b2, wd, bd)


if __name__ == "__main__":
    key = jax.random.PRNGKey(0)
    k_x, k_e, k_p = jax.random.split(key, 3)

    N = 16              # number of graph nodes
    IN_CH = 4           # in_channels
    HID_CH = 32         # hidden_channels
    OUT_CH = 16         # out_channels
    E = 24              # number of directed edges

    x = jax.random.normal(k_x, (N, IN_CH), jnp.float32)
    edge_index = jax.random.randint(k_e, (2, E), 0, N, dtype=jnp.int32)
    params = init_params(k_p, IN_CH, HID_CH, OUT_CH)

    # Static graph: build normalized adjacency once, outside the jitted step.
    a_norm = build_normalized_adjacency(edge_index, N)

    fwd = jax.jit(gnn_autoencoder_apply)
    x_hat = fwd(x, a_norm, params)
    jax.block_until_ready(x_hat)
    assert x_hat.shape == (N, IN_CH), x_hat.shape

    # Loose tolerance: MXU operands are bf16 (f32 accumulation).
    ref = reference_forward(x, a_norm, params)
    assert jnp.allclose(x_hat, ref, atol=5e-2, rtol=5e-2), float(
        jnp.max(jnp.abs(x_hat - ref)))

    print("KERNEL_OK")
</pallas_src>

<mosaic_0001>
module attributes {stable_mosaic.version = 11 : i64} {
  func.func @project_kernel(%arg0: i32, %arg1: memref<128x128xbf16, #tpu.memory_space<vmem>>, %arg2: memref<128x128xbf16, #tpu.memory_space<vmem>>, %arg3: memref<128x128xbf16, #tpu.memory_space<vmem>>) attributes {dimension_semantics = [#tpu.dimension_semantics<parallel>], iteration_bounds = array<i64: 1>, scalar_prefetch = 0 : i64, scratch_operands = 0 : i64, tpu.core_type = #tpu.core_type<tc>, window_params = [{transform_indices = @transform_0, window_bounds = array<i64: 128, 128>}, {pipeline_mode = #tpu.pipeline_mode<synchronous>, transform_indices = @transform_1, window_bounds = array<i64: 128, 128>}, {transform_indices = @transform_2, window_bounds = array<i64: 128, 128>}]} {
    %c0 = arith.constant 0 : index
    %c0_0 = arith.constant 0 : index
    %0 = vector.load %arg1[%c0, %c0_0] : memref<128x128xbf16, #tpu.memory_space<vmem>>, vector<128x128xbf16>
    %c0_1 = arith.constant 0 : index
    %c0_2 = arith.constant 0 : index
    %1 = vector.load %arg2[%c0_1, %c0_2] : memref<128x128xbf16, #tpu.memory_space<vmem>>, vector<128x128xbf16>
    %cst = arith.constant dense<0.000000e+00> : vector<128x128xf32>
    %2 = tpu.matmul %0, %1, %cst {dimension_numbers = #tpu.dot_dimension_numbers<[1], [0], [0], [1], [0, 0, 1, 1], [], []>} : vector<128x128xbf16>, vector<128x128xbf16>, vector<128x128xf32> -> vector<128x128xf32>
    %3 = arith.truncf %2 : vector<128x128xf32> to vector<128x128xbf16>
    %c0_3 = arith.constant 0 : index
    %c0_4 = arith.constant 0 : index
    %4 = vector.load %arg3[%c0_3, %c0_4] : memref<128x128xbf16, #tpu.memory_space<vmem>>, vector<128x128xbf16>
    tpu.vector_store %arg3[%c0_3, %c0_4], %3 {strides = array<i32>} : memref<128x128xbf16, #tpu.memory_space<vmem>>, vector<128x128xbf16>,
    return
  }
  func.func @transform_0(%arg0: i32) -> (i32, i32) {
    %c0_i32 = arith.constant 0 : i32
    %c0_i32_0 = arith.constant 0 : i32
    return %arg0, %c0_i32 : i32, i32
  }
  func.func @transform_1(%arg0: i32) -> (i32, i32) {
    %c0_i32 = arith.constant 0 : i32
    %c0_i32_0 = arith.constant 0 : i32
    %c0_i32_1 = arith.constant 0 : i32
    return %c0_i32, %c0_i32_0 : i32, i32
  }
  func.func @transform_2(%arg0: i32) -> (i32, i32) {
    %c0_i32 = arith.constant 0 : i32
    %c0_i32_0 = arith.constant 0 : i32
    return %arg0, %c0_i32 : i32, i32
  }
}

module attributes {stable_mosaic.version = 11 : i64} {
  func.func @agg_relu_project_kernel(%arg0: i32, %arg1: memref<128x128xbf16, #tpu.memory_space<vmem>>, %arg2: memref<128x128xbf16, #tpu.memory_space<vmem>>, %arg3: memref<1x128xf32, #tpu.memory_space<vmem>>, %arg4: memref<128x128xbf16, #tpu.memory_space<vmem>>, %arg5: memref<128x128xbf16, #tpu.memory_space<vmem>>) attributes {dimension_semantics = [#tpu.dimension_semantics<parallel>], iteration_bounds = array<i64: 1>, scalar_prefetch = 0 : i64, scratch_operands = 0 : i64, tpu.core_type = #tpu.core_type<tc>, window_params = [{transform_indices = @transform_0, window_bounds = array<i64: 128, 128>}, {pipeline_mode = #tpu.pipeline_mode<synchronous>, transform_indices = @transform_1, window_bounds = array<i64: 128, 128>}, {pipeline_mode = #tpu.pipeline_mode<synchronous>, transform_indices = @transform_2, window_bounds = array<i64: 1, 128>}, {pipeline_mode = #tpu.pipeline_mode<synchronous>, transform_indices = @transform_3, window_bounds = array<i64: 128, 128>}, {transform_indices = @transform_4, window_bounds = array<i64: 128, 128>}]} {
    %c0 = arith.constant 0 : index
    %c0_0 = arith.constant 0 : index
    %0 = vector.load %arg1[%c0, %c0_0] : memref<128x128xbf16, #tpu.memory_space<vmem>>, vector<128x128xbf16>
    %c0_1 = arith.constant 0 : index
    %c0_2 = arith.constant 0 : index
    %1 = vector.load %arg2[%c0_1, %c0_2] : memref<128x128xbf16, #tpu.memory_space<vmem>>, vector<128x128xbf16>
    %cst = arith.constant dense<0.000000e+00> : vector<128x128xf32>
    %2 = tpu.matmul %0, %1, %cst {dimension_numbers = #tpu.dot_dimension_numbers<[1], [0], [0], [1], [0, 0, 1, 1], [], []>} : vector<128x128xbf16>, vector<128x128xbf16>, vector<128x128xf32> -> vector<128x128xf32>
    %c0_3 = arith.constant 0 : index
    %c0_4 = arith.constant 0 : index
    %3 = vector.load %arg3[%c0_3, %c0_4] : memref<1x128xf32, #tpu.memory_space<vmem>>, vector<1x128xf32>
    %4 = vector.broadcast %3 : vector<1x128xf32> to vector<128x128xf32>
    %5 = arith.addf %2, %4 : vector<128x128xf32>
    %cst_5 = arith.constant 0.000000e+00 : f32
    %6 = vector.broadcast %cst_5 : f32 to vector<128x128xf32>
    %7 = arith.maximumf %5, %6 : vector<128x128xf32>
    %8 = arith.truncf %7 : vector<128x128xf32> to vector<128x128xbf16>
    %c0_6 = arith.constant 0 : index
    %c0_7 = arith.constant 0 : index
    %9 = vector.load %arg4[%c0_6, %c0_7] : memref<128x128xbf16, #tpu.memory_space<vmem>>, vector<128x128xbf16>
    %cst_8 = arith.constant dense<0.000000e+00> : vector<128x128xf32>
    %10 = tpu.matmul %8, %9, %cst_8 {dimension_numbers = #tpu.dot_dimension_numbers<[1], [0], [0], [1], [0, 0, 1, 1], [], []>} : vector<128x128xbf16>, vector<128x128xbf16>, vector<128x128xf32> -> vector<128x128xf32>
    %11 = arith.truncf %10 : vector<128x128xf32> to vector<128x128xbf16>
    %c0_9 = arith.constant 0 : index
    %c0_10 = arith.constant 0 : index
    %12 = vector.load %arg5[%c0_9, %c0_10] : memref<128x128xbf16, #tpu.memory_space<vmem>>, vector<128x128xbf16>
    tpu.vector_store %arg5[%c0_9, %c0_10], %11 {strides = array<i32>} : memref<128x128xbf16, #tpu.memory_space<vmem>>, vector<128x128xbf16>,
    return
  }
  func.func @transform_0(%arg0: i32) -> (i32, i32) {
    %c0_i32 = arith.constant 0 : i32
    %c0_i32_0 = arith.constant 0 : i32
    return %arg0, %c0_i32 : i32, i32
  }
  func.func @transform_1(%arg0: i32) -> (i32, i32) {
    %c0_i32 = arith.constant 0 : i32
    %c0_i32_0 = arith.constant 0 : i32
    %c0_i32_1 = arith.constant 0 : i32
    return %c0_i32, %c0_i32_0 : i32, i32
  }
  func.func @transform_2(%arg0: i32) -> (i32, i32) {
    %c0_i32 = arith.constant 0 : i32
    %c0_i32_0 = arith.constant 0 : i32
    %c0_i32_1 = arith.constant 0 : i32
    return %c0_i32, %c0_i32_0 : i32, i32
  }
  func.func @transform_3(%arg0: i32) -> (i32, i32) {
    %c0_i32 = arith.constant 0 : i32
    %c0_i32_0 = arith.constant 0 : i32
    %c0_i32_1 = arith.constant 0 : i32
    return %c0_i32, %c0_i32_0 : i32, i32
  }
  func.func @transform_4(%arg0: i32) -> (i32, i32) {
    %c0_i32 = arith.constant 0 : i32
    %c0_i32_0 = arith.constant 0 : i32
    return %arg0, %c0_i32 : i32, i32
  }
}

module attributes {stable_mosaic.version = 11 : i64} {
  func.func @agg_decode_kernel(%arg0: i32, %arg1: memref<128x128xbf16, #tpu.memory_space<vmem>>, %arg2: memref<128x128xbf16, #tpu.memory_space<vmem>>, %arg3: memref<1x128xf32, #tpu.memory_space<vmem>>, %arg4: memref<128x128xbf16, #tpu.memory_space<vmem>>, %arg5: memref<1x128xf32, #tpu.memory_space<vmem>>, %arg6: memref<128x128xf32, #tpu.memory_space<vmem>>) attributes {dimension_semantics = [#tpu.dimension_semantics<parallel>], iteration_bounds = array<i64: 1>, scalar_prefetch = 0 : i64, scratch_operands = 0 : i64, tpu.core_type = #tpu.core_type<tc>, window_params = [{transform_indices = @transform_0, window_bounds = array<i64: 128, 128>}, {pipeline_mode = #tpu.pipeline_mode<synchronous>, transform_indices = @transform_1, window_bounds = array<i64: 128, 128>}, {pipeline_mode = #tpu.pipeline_mode<synchronous>, transform_indices = @transform_2, window_bounds = array<i64: 1, 128>}, {pipeline_mode = #tpu.pipeline_mode<synchronous>, transform_indices = @transform_3, window_bounds = array<i64: 128, 128>}, {pipeline_mode = #tpu.pipeline_mode<synchronous>, transform_indices = @transform_4, window_bounds = array<i64: 1, 128>}, {transform_indices = @transform_5, window_bounds = array<i64: 128, 128>}]} {
    %c0 = arith.constant 0 : index
    %c0_0 = arith.constant 0 : index
    %0 = vector.load %arg1[%c0, %c0_0] : memref<128x128xbf16, #tpu.memory_space<vmem>>, vector<128x128xbf16>
    %c0_1 = arith.constant 0 : index
    %c0_2 = arith.constant 0 : index
    %1 = vector.load %arg2[%c0_1, %c0_2] : memref<128x128xbf16, #tpu.memory_space<vmem>>, vector<128x128xbf16>
    %cst = arith.constant dense<0.000000e+00> : vector<128x128xf32>
    %2 = tpu.matmul %0, %1, %cst {dimension_numbers = #tpu.dot_dimension_numbers<[1], [0], [0], [1], [0, 0, 1, 1], [], []>} : vector<128x128xbf16>, vector<128x128xbf16>, vector<128x128xf32> -> vector<128x128xf32>
    %c0_3 = arith.constant 0 : index
    %c0_4 = arith.constant 0 : index
    %3 = vector.load %arg3[%c0_3, %c0_4] : memref<1x128xf32, #tpu.memory_space<vmem>>, vector<1x128xf32>
    %4 = vector.broadcast %3 : vector<1x128xf32> to vector<128x128xf32>
    %5 = arith.addf %2, %4 : vector<128x128xf32>
    %6 = arith.truncf %5 : vector<128x128xf32> to vector<128x128xbf16>
    %c0_5 = arith.constant 0 : index
    %c0_6 = arith.constant 0 : index
    %7 = vector.load %arg4[%c0_5, %c0_6] : memref<128x128xbf16, #tpu.memory_space<vmem>>, vector<128x128xbf16>
    %cst_7 = arith.constant dense<0.000000e+00> : vector<128x128xf32>
    %8 = tpu.matmul %6, %7, %cst_7 {dimension_numbers = #tpu.dot_dimension_numbers<[1], [0], [0], [1], [0, 0, 1, 1], [], []>} : vector<128x128xbf16>, vector<128x128xbf16>, vector<128x128xf32> -> vector<128x128xf32>
    %c0_8 = arith.constant 0 : index
    %c0_9 = arith.constant 0 : index
    %9 = vector.load %arg5[%c0_8, %c0_9] : memref<1x128xf32, #tpu.memory_space<vmem>>, vector<1x128xf32>
    %10 = vector.broadcast %9 : vector<1x128xf32> to vector<128x128xf32>
    %11 = arith.addf %8, %10 : vector<128x128xf32>
    %c0_10 = arith.constant 0 : index
    %c0_11 = arith.constant 0 : index
    %12 = vector.load %arg6[%c0_10, %c0_11] : memref<128x128xf32, #tpu.memory_space<vmem>>, vector<128x128xf32>
    tpu.vector_store %arg6[%c0_10, %c0_11], %11 {strides = array<i32>} : memref<128x128xf32, #tpu.memory_space<vmem>>, vector<128x128xf32>,
    return
  }
  func.func @transform_0(%arg0: i32) -> (i32, i32) {
    %c0_i32 = arith.constant 0 : i32
    %c0_i32_0 = arith.constant 0 : i32
    return %arg0, %c0_i32 : i32, i32
  }
  func.func @transform_1(%arg0: i32) -> (i32, i32) {
    %c0_i32 = arith.constant 0 : i32
    %c0_i32_0 = arith.constant 0 : i32
    %c0_i32_1 = arith.constant 0 : i32
    return %c0_i32, %c0_i32_0 : i32, i32
  }
  func.func @transform_2(%arg0: i32) -> (i32, i32) {
    %c0_i32 = arith.constant 0 : i32
    %c0_i32_0 = arith.constant 0 : i32
    %c0_i32_1 = arith.constant 0 : i32
    return %c0_i32, %c0_i32_0 : i32, i32
  }
  func.func @transform_3(%arg0: i32) -> (i32, i32) {
    %c0_i32 = arith.constant 0 : i32
    %c0_i32_0 = arith.constant 0 : i32
    %c0_i32_1 = arith.constant 0 : i32
    return %c0_i32, %c0_i32_0 : i32, i32
  }
  func.func @transform_4(%arg0: i32) -> (i32, i32) {
    %c0_i32 = arith.constant 0 : i32
    %c0_i32_0 = arith.constant 0 : i32
    %c0_i32_1 = arith.constant 0 : i32
    return %c0_i32, %c0_i32_0 : i32, i32
  }
  func.func @transform_5(%arg0: i32) -> (i32, i32) {
    %c0_i32 = arith.constant 0 : i32
    %c0_i32_0 = arith.constant 0 : i32
    return %arg0, %c0_i32 : i32, i32
  }
}

</mosaic_0001>

<llo_original>
// kernel: gnn_autoencoder_apply.4
$region0: #{gnn_autoencoder_apply.4}
  #allocation0 [shape = 'u32[]', space=smem, size = 0x4, offset = 0x4, fixed_abs, tag = 'smem constant byte address 0x4 - core index']
  #allocation1 [shape = 'u32[144,128]{1,0:T(1,128)}', space=vmem, size = 0x12000, scoped, tag = 'internal scratch']
  %s0 = inlined_call_operand.vmem [shape: bf16[128,128], index: 0, kind: input, shape index: {}]
  %s1 = inlined_call_operand.vmem [shape: bf16[128,128], index: 1, kind: input, shape index: {}]
  %s2 = inlined_call_operand.vmem [shape: f32[1,128], index: 2, kind: input, shape index: {}]
  %s3 = inlined_call_operand.vmem [shape: bf16[128,128], index: 3, kind: input, shape index: {}]
  %s4 = inlined_call_operand.vmem [shape: bf16[128,128], index: 4, kind: output, shape index: {}]
  %s5 = sld [smem:[#allocation0]]
  $region26: #{gnn_autoencoder_apply.4} parent=0
    _
  %s7 = ssub.s32 1, %s5
  %s8 = scalar_select 0, %s7, %s5
  // Predicated region
  $region2: #{gnn_autoencoder_apply.4} parent=0 // pred_check
    _
  $region3: #{gnn_autoencoder_apply.4} parent=0 // pred_check_branch
    %10 = sbr.rel (0) target = $region5
  $region4: #{gnn_autoencoder_apply.4} parent=0 // pred_region
    _
  $region5: #{gnn_autoencoder_apply.4} parent=0 // pred_fallthru
    _
  // Predicated region
  $region6: #{gnn_autoencoder_apply.4} parent=0 // pred_check
    _
  $region7: #{gnn_autoencoder_apply.4} parent=0 // pred_check_branch
    %12 = sbr.rel (0) target = $region9
  $region8: #{gnn_autoencoder_apply.4} parent=0 // pred_region
    _
  $region9: #{gnn_autoencoder_apply.4} parent=0 // pred_fallthru
    _
  // Predicated region
  $region10: #{gnn_autoencoder_apply.4} parent=0 // pred_check
    _
  $region11: #{gnn_autoencoder_apply.4} parent=0 // pred_check_branch
    %14 = sbr.rel (0) target = $region13
  $region12: #{gnn_autoencoder_apply.4} parent=0 // pred_region
    _
  $region13: #{gnn_autoencoder_apply.4} parent=0 // pred_fallthru
    _
  // Predicated region
  $region14: #{gnn_autoencoder_apply.4} parent=0 // pred_check
    _
  $region15: #{gnn_autoencoder_apply.4} parent=0 // pred_check_branch
    %16 = sbr.rel (0) target = $region17
  $region16: #{gnn_autoencoder_apply.4} parent=0 // pred_region
    _
  $region17: #{gnn_autoencoder_apply.4} parent=0 // pred_fallthru
    _
  %v18 = vld [vmem:[%s0] sm:$0xf]
  %v19 = vld [vmem:[%s0 + $0x4] sm:$0xf]
  %v20 = vld [vmem:[%s0 + $0x8] sm:$0xf]
  %v21 = vld [vmem:[%s0 + $0xc] sm:$0xf]
  %v22 = vld [vmem:[%s0 + $0x10] sm:$0xf]
  %v23 = vld [vmem:[%s0 + $0x14] sm:$0xf]
  %v24 = vld [vmem:[%s0 + $0x18] sm:$0xf]
  %v25 = vld [vmem:[%s0 + $0x1c] sm:$0xf]
  %v26 = vld [vmem:[%s0 + $0x20] sm:$0xf]
  %v27 = vld [vmem:[%s0 + $0x24] sm:$0xf]
  %v28 = vld [vmem:[%s0 + $0x28] sm:$0xf]
  %v29 = vld [vmem:[%s0 + $0x2c] sm:$0xf]
  %v30 = vld [vmem:[%s0 + $0x30] sm:$0xf]
  %v31 = vld [vmem:[%s0 + $0x34] sm:$0xf]
  %v32 = vld [vmem:[%s0 + $0x38] sm:$0xf]
  %v33 = vld [vmem:[%s0 + $0x3c] sm:$0xf]
  %v34 = vld [vmem:[%s1] sm:$0xf]
  %v35 = vld [vmem:[%s1 + $0x4] sm:$0xf]
  %v36 = vld [vmem:[%s1 + $0x8] sm:$0xf]
  %v37 = vld [vmem:[%s1 + $0xc] sm:$0xf]
  %v38 = vld [vmem:[%s1 + $0x10] sm:$0xf]
  %v39 = vld [vmem:[%s1 + $0x14] sm:$0xf]
  %v40 = vld [vmem:[%s1 + $0x18] sm:$0xf]
  %v41 = vld [vmem:[%s1 + $0x1c] sm:$0xf]
  %v42 = vld [vmem:[%s1 + $0x20] sm:$0xf]
  %v43 = vld [vmem:[%s1 + $0x24] sm:$0xf]
  %v44 = vld [vmem:[%s1 + $0x28] sm:$0xf]
  %v45 = vld [vmem:[%s1 + $0x2c] sm:$0xf]
  %v46 = vld [vmem:[%s1 + $0x30] sm:$0xf]
  %v47 = vld [vmem:[%s1 + $0x34] sm:$0xf]
  %v48 = vld [vmem:[%s1 + $0x38] sm:$0xf]
  %v49 = vld [vmem:[%s1 + $0x3c] sm:$0xf]
  %v50 = vld [vmem:[%s2] sm:$0x1]
  %v52 = vlaneseq
  %v53 = vshrl.u32 %v52, 7
  %v54 = vsub.s32 0, %v53
  %v55 = vrot.slane %v50, %v54
  %v73 = vunpack.c.l.b16 %v18
  %v74 = vunpack.c.l.b16 %v19
  %v75 = vunpack.c.l.b16 %v20
  %v76 = vunpack.c.l.b16 %v21
  %v77 = vunpack.c.l.b16 %v22
  %v78 = vunpack.c.l.b16 %v23
  %v79 = vunpack.c.l.b16 %v24
  %v80 = vunpack.c.l.b16 %v25
  %v81 = vunpack.c.l.b16 %v26
  %v82 = vunpack.c.l.b16 %v27
  %v83 = vunpack.c.l.b16 %v28
  %v84 = vunpack.c.l.b16 %v29
  %v85 = vunpack.c.l.b16 %v30
  %v86 = vunpack.c.l.b16 %v31
  %v87 = vunpack.c.l.b16 %v32
  %v88 = vunpack.c.l.b16 %v33
  %v89 = vpack.c.b16 %v74, %v73
  %v90 = vpack.c.b16 %v76, %v75
  %v91 = vpack.c.b16 %v78, %v77
  %v92 = vpack.c.b16 %v80, %v79
  %v93 = vpack.c.b16 %v82, %v81
  %v94 = vpack.c.b16 %v84, %v83
  %v95 = vpack.c.b16 %v86, %v85
  %v96 = vpack.c.b16 %v88, %v87
  %v121 = vunpack.c.l.b16 %v34
  %v122 = vunpack.c.l.b16 %v35
  %v123 = vunpack.c.l.b16 %v36
  %v124 = vunpack.c.l.b16 %v37
  %v125 = vunpack.c.l.b16 %v38
  %v126 = vunpack.c.l.b16 %v39
  %v127 = vunpack.c.l.b16 %v40
  %v128 = vunpack.c.l.b16 %v41
  %v129 = vunpack.c.l.b16 %v42
  %v130 = vunpack.c.l.b16 %v43
  %v131 = vunpack.c.l.b16 %v44
  %v132 = vunpack.c.l.b16 %v45
  %v133 = vunpack.c.l.b16 %v46
  %v134 = vunpack.c.l.b16 %v47
  %v135 = vunpack.c.l.b16 %v48
  %v136 = vunpack.c.l.b16 %v49
  %v137 = vpack.c.b16 %v122, %v121
  %v138 = vpack.c.b16 %v124, %v123
  %v139 = vpack.c.b16 %v126, %v125
  %v140 = vpack.c.b16 %v128, %v127
  %v141 = vpack.c.b16 %v130, %v129
  %v142 = vpack.c.b16 %v132, %v131
  %v143 = vpack.c.b16 %v134, %v133
  %v144 = vpack.c.b16 %v136, %v135
  %153 = vmatprep.subr.bf16.mxu0 0
  %154 = vmatpush1.bf16.msra.mxu0 %v137
  %155 = vmatprep.subr.bf16.mxu0 0
  %156 = vmatpush1.bf16.msra.mxu0 %v138
  %157 = vmatprep.subr.bf16.mxu0 0
  %158 = vmatpush1.bf16.msra.mxu0 %v139
  %159 = vmatprep.subr.bf16.mxu0 0
  %160 = vmatpush1.bf16.msra.mxu0 %v140
  %161 = vmatprep.subr.bf16.mxu0 0
  %162 = vmatpush1.bf16.msra.mxu0 %v141
  %163 = vmatprep.subr.bf16.mxu0 0
  %164 = vmatpush1.bf16.msra.mxu0 %v142
  %165 = vmatprep.subr.bf16.mxu0 0
  %166 = vmatpush1.bf16.msra.mxu0 %v143
  %167 = vmatprep.subr.bf16.mxu0 0
  %168 = vmatpush1.bf16.msra.mxu0 %v144
  %169 = vmatprep.subr.bf16.mxu0 0
  %170 = vmatpush1.bf16.msra.mxu0 0
  %171 = vmatprep.subr.bf16.mxu0 0
  %172 = vmatpush1.bf16.msra.mxu0 0
  %173 = vmatprep.subr.bf16.mxu0 0
  %174 = vmatpush1.bf16.msra.mxu0 0
  %175 = vmatprep.subr.bf16.mxu0 0
  %176 = vmatpush1.bf16.msra.mxu0 0
  %177 = vmatprep.subr.bf16.mxu0 0
  %178 = vmatpush1.bf16.msra.mxu0 0
  %179 = vmatprep.subr.bf16.mxu0 0
  %180 = vmatpush1.bf16.msra.mxu0 0
  %181 = vmatprep.subr.bf16.mxu0 0
  %182 = vmatpush1.bf16.msra.mxu0 0
  %183 = vmatprep.subr.bf16.mxu0 0
  %184 = vmatpush1.bf16.msra.mxu0 0
  %185 = vmatprep.mubr.bf16.mxu0 0
  %186 = vmatmul.mubr.bf16.gmra.mrb[0].mxu0 %v89
  %v187 = vpop.f32.mrb[0].mxu0
  %v188 = vadd.f32 %v55, %v187
  %v189 = vpop.f32.mrb[0].mxu0
  %v190 = vpop.f32.mrb[0].mxu0
  %v191 = vadd.f32 %v55, %v190
  %v192 = vpop.f32.mrb[0].mxu0
  %193 = vmatprep.mubr.bf16.mxu0 0
  %194 = vmatmul.mubr.bf16.gmra.mrb[0].mxu0 %v90
  %v195 = vpop.f32.mrb[0].mxu0
  %v196 = vadd.f32 %v55, %v195
  %v197 = vpop.f32.mrb[0].mxu0
  %v198 = vpop.f32.mrb[0].mxu0
  %v199 = vadd.f32 %v55, %v198
  %v200 = vpop.f32.mrb[0].mxu0
  %201 = vmatprep.mubr.bf16.mxu0 0
  %202 = vmatmul.mubr.bf16.gmra.mrb[0].mxu0 %v91
  %v203 = vpop.f32.mrb[0].mxu0
  %v204 = vadd.f32 %v55, %v203
  %v205 = vpop.f32.mrb[0].mxu0
  %v206 = vpop.f32.mrb[0].mxu0
  %v207 = vadd.f32 %v55, %v206
  %v208 = vpop.f32.mrb[0].mxu0
  %209 = vmatprep.mubr.bf16.mxu0 0
  %210 = vmatmul.mubr.bf16.gmra.mrb[0].mxu0 %v92
  %v211 = vpop.f32.mrb[0].mxu0
  %v212 = vadd.f32 %v55, %v211
  %v213 = vpop.f32.mrb[0].mxu0
  %v214 = vpop.f32.mrb[0].mxu0
  %v215 = vadd.f32 %v55, %v214
  %v216 = vpop.f32.mrb[0].mxu0
  %217 = vmatprep.mubr.bf16.mxu0 0
  %218 = vmatmul.mubr.bf16.gmra.mrb[0].mxu0 %v93
  %v219 = vpop.f32.mrb[0].mxu0
  %v220 = vadd.f32 %v55, %v219
  %v221 = vpop.f32.mrb[0].mxu0
  %v222 = vpop.f32.mrb[0].mxu0
  %v223 = vadd.f32 %v55, %v222
  %v224 = vpop.f32.mrb[0].mxu0
  %225 = vmatprep.mubr.bf16.mxu0 0
  %226 = vmatmul.mubr.bf16.gmra.mrb[0].mxu0 %v94
  %v227 = vpop.f32.mrb[0].mxu0
  %v228 = vadd.f32 %v55, %v227
  %v229 = vpop.f32.mrb[0].mxu0
  %v230 = vpop.f32.mrb[0].mxu0
  %v231 = vadd.f32 %v55, %v230
  %v232 = vpop.f32.mrb[0].mxu0
  %233 = vmatprep.mubr.bf16.mxu0 0
  %234 = vmatmul.mubr.bf16.gmra.mrb[0].mxu0 %v95
  %v235 = vpop.f32.mrb[0].mxu0
  %v236 = vadd.f32 %v55, %v235
  %v237 = vpop.f32.mrb[0].mxu0
  %v238 = vpop.f32.mrb[0].mxu0
  %v239 = vadd.f32 %v55, %v238
  %v240 = vpop.f32.mrb[0].mxu0
  %241 = vmatprep.mubr.bf16.mxu0 0
  %242 = vmatmul.mubr.bf16.gmra.mrb[0].mxu0 %v96
  %v243 = vpop.f32.mrb[0].mxu0
  %v244 = vadd.f32 %v55, %v243
  %v245 = vpop.f32.mrb[0].mxu0
  %v246 = vpop.f32.mrb[0].mxu0
  %v247 = vadd.f32 %v55, %v246
  %v248 = vpop.f32.mrb[0].mxu0
  %249 = vdwg.mxu0
  %v250 = vmax.f32 %v188, 0.0
  %v251 = vmax.f32 %v191, 0.0
  %v252 = vmax.f32 %v196, 0.0
  %v253 = vmax.f32 %v199, 0.0
  %v254 = vmax.f32 %v204, 0.0
  %v255 = vmax.f32 %v207, 0.0
  %v256 = vmax.f32 %v212, 0.0
  %v257 = vmax.f32 %v215, 0.0
  %v258 = vmax.f32 %v220, 0.0
  %v259 = vmax.f32 %v223, 0.0
  %v260 = vmax.f32 %v228, 0.0
  %v261 = vmax.f32 %v231, 0.0
  %v262 = vmax.f32 %v236, 0.0
  %v263 = vmax.f32 %v239, 0.0
  %v264 = vmax.f32 %v244, 0.0
  %v265 = vmax.f32 %v247, 0.0
  %v266 = vpack.c.bf16 %v251, %v250
  %v267 = vpack.c.bf16 %v253, %v252
  %v268 = vpack.c.bf16 %v255, %v254
  %v269 = vpack.c.bf16 %v257, %v256
  %v270 = vpack.c.bf16 %v259, %v258
  %v271 = vpack.c.bf16 %v261, %v260
  %v272 = vpack.c.bf16 %v263, %v262
  %v273 = vpack.c.bf16 %v265, %v264
  %v274 = vld [vmem:[%s3] sm:$0xf]
  %v275 = vld [vmem:[%s3 + $0x4] sm:$0xf]
  %v276 = vld [vmem:[%s3 + $0x8] sm:$0xf]
  %v277 = vld [vmem:[%s3 + $0xc] sm:$0xf]
  %v278 = vld [vmem:[%s3 + $0x10] sm:$0xf]
  %v279 = vld [vmem:[%s3 + $0x14] sm:$0xf]
  %v280 = vld [vmem:[%s3 + $0x18] sm:$0xf]
  %v281 = vld [vmem:[%s3 + $0x1c] sm:$0xf]
  %v282 = vld [vmem:[%s3 + $0x20] sm:$0xf]
  %v283 = vld [vmem:[%s3 + $0x24] sm:$0xf]
  %v284 = vld [vmem:[%s3 + $0x28] sm:$0xf]
  %v285 = vld [vmem:[%s3 + $0x2c] sm:$0xf]
  %v286 = vld [vmem:[%s3 + $0x30] sm:$0xf]
  %v287 = vld [vmem:[%s3 + $0x34] sm:$0xf]
  %v288 = vld [vmem:[%s3 + $0x38] sm:$0xf]
  %v289 = vld [vmem:[%s3 + $0x3c] sm:$0xf]
  %v306 = vunpack.c.l.b16 %v274
  %v307 = vunpack.c.l.b16 %v275
  %v308 = vunpack.c.l.b16 %v276
  %v309 = vunpack.c.l.b16 %v277
  %v310 = vunpack.c.l.b16 %v278
  %v311 = vunpack.c.l.b16 %v279
  %v312 = vunpack.c.l.b16 %v280
  %v313 = vunpack.c.l.b16 %v281
  %v314 = vunpack.c.l.b16 %v282
  %v315 = vunpack.c.l.b16 %v283
  %v316 = vunpack.c.l.b16 %v284
  %v317 = vunpack.c.l.b16 %v285
  %v318 = vunpack.c.l.b16 %v286
  %v319 = vunpack.c.l.b16 %v287
  %v320 = vunpack.c.l.b16 %v288
  %v321 = vunpack.c.l.b16 %v289
  %v322 = vpack.c.b16 %v307, %v306
  %v323 = vpack.c.b16 %v309, %v308
  %v324 = vpack.c.b16 %v311, %v310
  %v325 = vpack.c.b16 %v313, %v312
  %v326 = vpack.c.b16 %v315, %v314
  %v327 = vpack.c.b16 %v317, %v316
  %v328 = vpack.c.b16 %v319, %v318
  %v329 = vpack.c.b16 %v321, %v320
  %338 = vmatprep.subr.bf16.mxu0 0
  %339 = vmatpush1.bf16.msra.mxu0 %v322
  %340 = vmatprep.subr.bf16.mxu0 0
  %341 = vmatpush1.bf16.msra.mxu0 %v323
  %342 = vmatprep.subr.bf16.mxu0 0
  %343 = vmatpush1.bf16.msra.mxu0 %v324
  %344 = vmatprep.subr.bf16.mxu0 0
  %345 = vmatpush1.bf16.msra.mxu0 %v325
  %346 = vmatprep.subr.bf16.mxu0 0
  %347 = vmatpush1.bf16.msra.mxu0 %v326
  %348 = vmatprep.subr.bf16.mxu0 0
  %349 = vmatpush1.bf16.msra.mxu0 %v327
  %350 = vmatprep.subr.bf16.mxu0 0
  %351 = vmatpush1.bf16.msra.mxu0 %v328
  %352 = vmatprep.subr.bf16.mxu0 0
  %353 = vmatpush1.bf16.msra.mxu0 %v329
  %354 = vmatprep.subr.bf16.mxu0 0
  %355 = vmatpush1.bf16.msra.mxu0 0
  %356 = vmatprep.subr.bf16.mxu0 0
  %357 = vmatpush1.bf16.msra.mxu0 0
  %358 = vmatprep.subr.bf16.mxu0 0
  %359 = vmatpush1.bf16.msra.mxu0 0
  %360 = vmatprep.subr.bf16.mxu0 0
  %361 = vmatpush1.bf16.msra.mxu0 0
  %362 = vmatprep.subr.bf16.mxu0 0
  %363 = vmatpush1.bf16.msra.mxu0 0
  %364 = vmatprep.subr.bf16.mxu0 0
  %365 = vmatpush1.bf16.msra.mxu0 0
  %366 = vmatprep.subr.bf16.mxu0 0
  %367 = vmatpush1.bf16.msra.mxu0 0
  %368 = vmatprep.subr.bf16.mxu0 0
  %369 = vmatpush1.bf16.msra.mxu0 0
  %370 = vmatprep.mubr.bf16.mxu0 0
  %371 = vmatmul.mubr.bf16.gmra.mrb[0].mxu0 %v266
  %v372 = vpop.f32.mrb[0].mxu0
  %v373 = vadd.f32 0.0, %v372
  %v374 = vpop.f32.mrb[0].mxu0
  %v375 = vpop.f32.mrb[0].mxu0
  %v376 = vadd.f32 0.0, %v375
  %v377 = vpop.f32.mrb[0].mxu0
  %378 = vmatprep.mubr.bf16.mxu0 0
  %379 = vmatmul.mubr.bf16.gmra.mrb[0].mxu0 %v267
  %v380 = vpop.f32.mrb[0].mxu0
  %v381 = vadd.f32 0.0, %v380
  %v382 = vpop.f32.mrb[0].mxu0
  %v383 = vpop.f32.mrb[0].mxu0
  %v384 = vadd.f32 0.0, %v383
  %v385 = vpop.f32.mrb[0].mxu0
  %386 = vmatprep.mubr.bf16.mxu0 0
  %387 = vmatmul.mubr.bf16.gmra.mrb[0].mxu0 %v268
  %v388 = vpop.f32.mrb[0].mxu0
  %v389 = vadd.f32 0.0, %v388
  %v390 = vpop.f32.mrb[0].mxu0
  %v391 = vpop.f32.mrb[0].mxu0
  %v392 = vadd.f32 0.0, %v391
  %v393 = vpop.f32.mrb[0].mxu0
  %394 = vmatprep.mubr.bf16.mxu0 0
  %395 = vmatmul.mubr.bf16.gmra.mrb[0].mxu0 %v269
  %v396 = vpop.f32.mrb[0].mxu0
  %v397 = vadd.f32 0.0, %v396
  %v398 = vpop.f32.mrb[0].mxu0
  %v399 = vpop.f32.mrb[0].mxu0
  %v400 = vadd.f32 0.0, %v399
  %v401 = vpop.f32.mrb[0].mxu0
  %402 = vmatprep.mubr.bf16.mxu0 0
  %403 = vmatmul.mubr.bf16.gmra.mrb[0].mxu0 %v270
  %v404 = vpop.f32.mrb[0].mxu0
  %v405 = vadd.f32 0.0, %v404
  %v406 = vpop.f32.mrb[0].mxu0
  %v407 = vpop.f32.mrb[0].mxu0
  %v408 = vadd.f32 0.0, %v407
  %v409 = vpop.f32.mrb[0].mxu0
  %410 = vmatprep.mubr.bf16.mxu0 0
  %411 = vmatmul.mubr.bf16.gmra.mrb[0].mxu0 %v271
  %v412 = vpop.f32.mrb[0].mxu0
  %v413 = vadd.f32 0.0, %v412
  %v414 = vpop.f32.mrb[0].mxu0
  %v415 = vpop.f32.mrb[0].mxu0
  %v416 = vadd.f32 0.0, %v415
  %v417 = vpop.f32.mrb[0].mxu0
  %418 = vmatprep.mubr.bf16.mxu0 0
  %419 = vmatmul.mubr.bf16.gmra.mrb[0].mxu0 %v272
  %v420 = vpop.f32.mrb[0].mxu0
  %v421 = vadd.f32 0.0, %v420
  %v422 = vpop.f32.mrb[0].mxu0
  %v423 = vpop.f32.mrb[0].mxu0
  %v424 = vadd.f32 0.0, %v423
  %v425 = vpop.f32.mrb[0].mxu0
  %426 = vmatprep.mubr.bf16.mxu0 0
  %427 = vmatmul.mubr.bf16.gmra.mrb[0].mxu0 %v273
  %v428 = vpop.f32.mrb[0].mxu0
  %v429 = vadd.f32 0.0, %v428
  %v430 = vpop.f32.mrb[0].mxu0
  %v431 = vpop.f32.mrb[0].mxu0
  %v432 = vadd.f32 0.0, %v431
  %v433 = vpop.f32.mrb[0].mxu0
  %434 = vdwg.mxu0
  %v435 = vpack.c.bf16 %v376, %v373
  %v436 = vpack.c.bf16 %v384, %v381
  %v437 = vpack.c.bf16 %v392, %v389
  %v438 = vpack.c.bf16 %v400, %v397
  %v439 = vpack.c.bf16 %v408, %v405
  %v440 = vpack.c.bf16 %v416, %v413
  %v441 = vpack.c.bf16 %v424, %v421
  %v442 = vpack.c.bf16 %v432, %v429
  %v451 = vunpack.c.l.b16 %v435
  %v452 = vunpack.c.h.b16 %v435
  %v453 = vunpack.c.l.b16 %v436
  %v454 = vunpack.c.h.b16 %v436
  %v455 = vunpack.c.l.b16 %v437
  %v456 = vunpack.c.h.b16 %v437
  %v457 = vunpack.c.l.b16 %v438
  %v458 = vunpack.c.h.b16 %v438
  %v459 = vunpack.c.l.b16 %v439
  %v460 = vunpack.c.h.b16 %v439
  %v461 = vunpack.c.l.b16 %v440
  %v462 = vunpack.c.h.b16 %v440
  %v463 = vunpack.c.l.b16 %v441
  %v464 = vunpack.c.h.b16 %v441
  %v465 = vunpack.c.l.b16 %v442
  %v466 = vunpack.c.h.b16 %v442
  %v467 = vpack.c.b16 %v451, %v451
  %v468 = vpack.c.b16 %v452, %v452
  %v469 = vpack.c.b16 %v453, %v453
  %v470 = vpack.c.b16 %v454, %v454
  %v471 = vpack.c.b16 %v455, %v455
  %v472 = vpack.c.b16 %v456, %v456
  %v473 = vpack.c.b16 %v457, %v457
  %v474 = vpack.c.b16 %v458, %v458
  %v475 = vpack.c.b16 %v459, %v459
  %v476 = vpack.c.b16 %v460, %v460
  %v477 = vpack.c.b16 %v461, %v461
  %v478 = vpack.c.b16 %v462, %v462
  %v479 = vpack.c.b16 %v463, %v463
  %v480 = vpack.c.b16 %v464, %v464
  %v481 = vpack.c.b16 %v465, %v465
  %v482 = vpack.c.b16 %v466, %v466
  %499 = vst [vmem:[%s4] sm:$0xf] %v467
  %500 = vst [vmem:[%s4 + $0x4] sm:$0xf] %v468
  %501 = vst [vmem:[%s4 + $0x8] sm:$0xf] %v469
  %502 = vst [vmem:[%s4 + $0xc] sm:$0xf] %v470
  %503 = vst [vmem:[%s4 + $0x10] sm:$0xf] %v471
  %504 = vst [vmem:[%s4 + $0x14] sm:$0xf] %v472
  %505 = vst [vmem:[%s4 + $0x18] sm:$0xf] %v473
  %506 = vst [vmem:[%s4 + $0x1c] sm:$0xf] %v474
  %507 = vst [vmem:[%s4 + $0x20] sm:$0xf] %v475
  %508 = vst [vmem:[%s4 + $0x24] sm:$0xf] %v476
  %509 = vst [vmem:[%s4 + $0x28] sm:$0xf] %v477
  %510 = vst [vmem:[%s4 + $0x2c] sm:$0xf] %v478
  %511 = vst [vmem:[%s4 + $0x30] sm:$0xf] %v479
  %512 = vst [vmem:[%s4 + $0x34] sm:$0xf] %v480
  %513 = vst [vmem:[%s4 + $0x38] sm:$0xf] %v481
  %514 = vst [vmem:[%s4 + $0x3c] sm:$0xf] %v482
  // Predicated region
  $region18: #{gnn_autoencoder_apply.4} parent=0 // pred_check
    _
  $region19: #{gnn_autoencoder_apply.4} parent=0 // pred_check_branch
    %516 = sbr.rel (0) target = $region21
  $region20: #{gnn_autoencoder_apply.4} parent=0 // pred_region
    _
  $region21: #{gnn_autoencoder_apply.4} parent=0 // pred_fallthru
    _
  // Predicated region
  $region22: #{gnn_autoencoder_apply.4} parent=0 // pred_check
    _
  $region23: #{gnn_autoencoder_apply.4} parent=0 // pred_check_branch
    %518 = sbr.rel (0) target = $region25
  $region24: #{gnn_autoencoder_apply.4} parent=0 // pred_region
    _
  $region25: #{gnn_autoencoder_apply.4} parent=0 // pred_fallthru
    _

// kernel: gnn_autoencoder_apply.3
$region0: #{gnn_autoencoder_apply.3}
  #allocation0 [shape = 'u32[]', space=smem, size = 0x4, offset = 0x4, fixed_abs, tag = 'smem constant byte address 0x4 - core index']
  #allocation1 [shape = 'u32[144,128]{1,0:T(1,128)}', space=vmem, size = 0x12000, scoped, tag = 'internal scratch']
  %s0 = inlined_call_operand.vmem [shape: bf16[128,128], index: 0, kind: input, shape index: {}]
  %s1 = inlined_call_operand.vmem [shape: bf16[128,128], index: 1, kind: input, shape index: {}]
  %s2 = inlined_call_operand.vmem [shape: bf16[128,128], index: 2, kind: output, shape index: {}]
  %s3 = sld [smem:[#allocation0]]
  $region18: #{gnn_autoencoder_apply.3} parent=0
    _
  %s5 = ssub.s32 1, %s3
  %s6 = scalar_select 0, %s5, %s3
  // Predicated region
  $region2: #{gnn_autoencoder_apply.3} parent=0 // pred_check
    _
  $region3: #{gnn_autoencoder_apply.3} parent=0 // pred_check_branch
    %8 = sbr.rel (0) target = $region5
  $region4: #{gnn_autoencoder_apply.3} parent=0 // pred_region
    _
  $region5: #{gnn_autoencoder_apply.3} parent=0 // pred_fallthru
    _
  // Predicated region
  $region6: #{gnn_autoencoder_apply.3} parent=0 // pred_check
    _
  $region7: #{gnn_autoencoder_apply.3} parent=0 // pred_check_branch
    %10 = sbr.rel (0) target = $region9
  $region8: #{gnn_autoencoder_apply.3} parent=0 // pred_region
    _
  $region9: #{gnn_autoencoder_apply.3} parent=0 // pred_fallthru
    _
  %v12 = vld [vmem:[%s0] sm:$0xf]
  %v13 = vld [vmem:[%s0 + $0x4] sm:$0xf]
  %v14 = vld [vmem:[%s0 + $0x8] sm:$0xf]
  %v15 = vld [vmem:[%s0 + $0xc] sm:$0xf]
  %v16 = vld [vmem:[%s0 + $0x10] sm:$0xf]
  %v17 = vld [vmem:[%s0 + $0x14] sm:$0xf]
  %v18 = vld [vmem:[%s0 + $0x18] sm:$0xf]
  %v19 = vld [vmem:[%s0 + $0x1c] sm:$0xf]
  %v20 = vld [vmem:[%s0 + $0x20] sm:$0xf]
  %v21 = vld [vmem:[%s0 + $0x24] sm:$0xf]
  %v22 = vld [vmem:[%s0 + $0x28] sm:$0xf]
  %v23 = vld [vmem:[%s0 + $0x2c] sm:$0xf]
  %v24 = vld [vmem:[%s0 + $0x30] sm:$0xf]
  %v25 = vld [vmem:[%s0 + $0x34] sm:$0xf]
  %v26 = vld [vmem:[%s0 + $0x38] sm:$0xf]
  %v27 = vld [vmem:[%s0 + $0x3c] sm:$0xf]
  %v28 = vld [vmem:[%s1] sm:$0xf]
  %v29 = vld [vmem:[%s1 + $0x4] sm:$0xf]
  %v30 = vld [vmem:[%s1 + $0x8] sm:$0xf]
  %v31 = vld [vmem:[%s1 + $0xc] sm:$0xf]
  %v32 = vld [vmem:[%s1 + $0x10] sm:$0xf]
  %v33 = vld [vmem:[%s1 + $0x14] sm:$0xf]
  %v34 = vld [vmem:[%s1 + $0x18] sm:$0xf]
  %v35 = vld [vmem:[%s1 + $0x1c] sm:$0xf]
  %v36 = vld [vmem:[%s1 + $0x20] sm:$0xf]
  %v37 = vld [vmem:[%s1 + $0x24] sm:$0xf]
  %v38 = vld [vmem:[%s1 + $0x28] sm:$0xf]
  %v39 = vld [vmem:[%s1 + $0x2c] sm:$0xf]
  %v40 = vld [vmem:[%s1 + $0x30] sm:$0xf]
  %v41 = vld [vmem:[%s1 + $0x34] sm:$0xf]
  %v42 = vld [vmem:[%s1 + $0x38] sm:$0xf]
  %v43 = vld [vmem:[%s1 + $0x3c] sm:$0xf]
  %v60 = vunpack.c.l.b16 %v12
  %v61 = vunpack.c.l.b16 %v13
  %v62 = vunpack.c.l.b16 %v14
  %v63 = vunpack.c.l.b16 %v15
  %v64 = vunpack.c.l.b16 %v16
  %v65 = vunpack.c.l.b16 %v17
  %v66 = vunpack.c.l.b16 %v18
  %v67 = vunpack.c.l.b16 %v19
  %v68 = vunpack.c.l.b16 %v20
  %v69 = vunpack.c.l.b16 %v21
  %v70 = vunpack.c.l.b16 %v22
  %v71 = vunpack.c.l.b16 %v23
  %v72 = vunpack.c.l.b16 %v24
  %v73 = vunpack.c.l.b16 %v25
  %v74 = vunpack.c.l.b16 %v26
  %v75 = vunpack.c.l.b16 %v27
  %v76 = vpack.c.b16 %v61, %v60
  %v77 = vpack.c.b16 %v63, %v62
  %v78 = vpack.c.b16 %v65, %v64
  %v79 = vpack.c.b16 %v67, %v66
  %v80 = vpack.c.b16 %v69, %v68
  %v81 = vpack.c.b16 %v71, %v70
  %v82 = vpack.c.b16 %v73, %v72
  %v83 = vpack.c.b16 %v75, %v74
  %v108 = vunpack.c.l.b16 %v28
  %v109 = vunpack.c.l.b16 %v29
  %v110 = vunpack.c.l.b16 %v30
  %v111 = vunpack.c.l.b16 %v31
  %v112 = vunpack.c.l.b16 %v32
  %v113 = vunpack.c.l.b16 %v33
  %v114 = vunpack.c.l.b16 %v34
  %v115 = vunpack.c.l.b16 %v35
  %v116 = vunpack.c.l.b16 %v36
  %v117 = vunpack.c.l.b16 %v37
  %v118 = vunpack.c.l.b16 %v38
  %v119 = vunpack.c.l.b16 %v39
  %v120 = vunpack.c.l.b16 %v40
  %v121 = vunpack.c.l.b16 %v41
  %v122 = vunpack.c.l.b16 %v42
  %v123 = vunpack.c.l.b16 %v43
  %v124 = vpack.c.b16 %v109, %v108
  %v125 = vpack.c.b16 %v111, %v110
  %v126 = vpack.c.b16 %v113, %v112
  %v127 = vpack.c.b16 %v115, %v114
  %v128 = vpack.c.b16 %v117, %v116
  %v129 = vpack.c.b16 %v119, %v118
  %v130 = vpack.c.b16 %v121, %v120
  %v131 = vpack.c.b16 %v123, %v122
  %140 = vmatprep.subr.bf16.mxu0 0
  %141 = vmatpush1.bf16.msra.mxu0 %v124
  %142 = vmatprep.subr.bf16.mxu0 0
  %143 = vmatpush1.bf16.msra.mxu0 %v125
  %144 = vmatprep.subr.bf16.mxu0 0
  %145 = vmatpush1.bf16.msra.mxu0 %v126
  %146 = vmatprep.subr.bf16.mxu0 0
  %147 = vmatpush1.bf16.msra.mxu0 %v127
  %148 = vmatprep.subr.bf16.mxu0 0
  %149 = vmatpush1.bf16.msra.mxu0 %v128
  %150 = vmatprep.subr.bf16.mxu0 0
  %151 = vmatpush1.bf16.msra.mxu0 %v129
  %152 = vmatprep.subr.bf16.mxu0 0
  %153 = vmatpush1.bf16.msra.mxu0 %v130
  %154 = vmatprep.subr.bf16.mxu0 0
  %155 = vmatpush1.bf16.msra.mxu0 %v131
  %156 = vmatprep.subr.bf16.mxu0 0
  %157 = vmatpush1.bf16.msra.mxu0 0
  %158 = vmatprep.subr.bf16.mxu0 0
  %159 = vmatpush1.bf16.msra.mxu0 0
  %160 = vmatprep.subr.bf16.mxu0 0
  %161 = vmatpush1.bf16.msra.mxu0 0
  %162 = vmatprep.subr.bf16.mxu0 0
  %163 = vmatpush1.bf16.msra.mxu0 0
  %164 = vmatprep.subr.bf16.mxu0 0
  %165 = vmatpush1.bf16.msra.mxu0 0
  %166 = vmatprep.subr.bf16.mxu0 0
  %167 = vmatpush1.bf16.msra.mxu0 0
  %168 = vmatprep.subr.bf16.mxu0 0
  %169 = vmatpush1.bf16.msra.mxu0 0
  %170 = vmatprep.subr.bf16.mxu0 0
  %171 = vmatpush1.bf16.msra.mxu0 0
  %172 = vmatprep.mubr.bf16.mxu0 0
  %173 = vmatmul.mubr.bf16.gmra.mrb[0].mxu0 %v76
  %v174 = vpop.f32.mrb[0].mxu0
  %v175 = vadd.f32 0.0, %v174
  %v176 = vpop.f32.mrb[0].mxu0
  %v177 = vpop.f32.mrb[0].mxu0
  %v178 = vadd.f32 0.0, %v177
  %v179 = vpop.f32.mrb[0].mxu0
  %180 = vmatprep.mubr.bf16.mxu0 0
  %181 = vmatmul.mubr.bf16.gmra.mrb[0].mxu0 %v77
  %v182 = vpop.f32.mrb[0].mxu0
  %v183 = vadd.f32 0.0, %v182
  %v184 = vpop.f32.mrb[0].mxu0
  %v185 = vpop.f32.mrb[0].mxu0
  %v186 = vadd.f32 0.0, %v185
  %v187 = vpop.f32.mrb[0].mxu0
  %188 = vmatprep.mubr.bf16.mxu0 0
  %189 = vmatmul.mubr.bf16.gmra.mrb[0].mxu0 %v78
  %v190 = vpop.f32.mrb[0].mxu0
  %v191 = vadd.f32 0.0, %v190
  %v192 = vpop.f32.mrb[0].mxu0
  %v193 = vpop.f32.mrb[0].mxu0
  %v194 = vadd.f32 0.0, %v193
  %v195 = vpop.f32.mrb[0].mxu0
  %196 = vmatprep.mubr.bf16.mxu0 0
  %197 = vmatmul.mubr.bf16.gmra.mrb[0].mxu0 %v79
  %v198 = vpop.f32.mrb[0].mxu0
  %v199 = vadd.f32 0.0, %v198
  %v200 = vpop.f32.mrb[0].mxu0
  %v201 = vpop.f32.mrb[0].mxu0
  %v202 = vadd.f32 0.0, %v201
  %v203 = vpop.f32.mrb[0].mxu0
  %204 = vmatprep.mubr.bf16.mxu0 0
  %205 = vmatmul.mubr.bf16.gmra.mrb[0].mxu0 %v80
  %v206 = vpop.f32.mrb[0].mxu0
  %v207 = vadd.f32 0.0, %v206
  %v208 = vpop.f32.mrb[0].mxu0
  %v209 = vpop.f32.mrb[0].mxu0
  %v210 = vadd.f32 0.0, %v209
  %v211 = vpop.f32.mrb[0].mxu0
  %212 = vmatprep.mubr.bf16.mxu0 0
  %213 = vmatmul.mubr.bf16.gmra.mrb[0].mxu0 %v81
  %v214 = vpop.f32.mrb[0].mxu0
  %v215 = vadd.f32 0.0, %v214
  %v216 = vpop.f32.mrb[0].mxu0
  %v217 = vpop.f32.mrb[0].mxu0
  %v218 = vadd.f32 0.0, %v217
  %v219 = vpop.f32.mrb[0].mxu0
  %220 = vmatprep.mubr.bf16.mxu0 0
  %221 = vmatmul.mubr.bf16.gmra.mrb[0].mxu0 %v82
  %v222 = vpop.f32.mrb[0].mxu0
  %v223 = vadd.f32 0.0, %v222
  %v224 = vpop.f32.mrb[0].mxu0
  %v225 = vpop.f32.mrb[0].mxu0
  %v226 = vadd.f32 0.0, %v225
  %v227 = vpop.f32.mrb[0].mxu0
  %228 = vmatprep.mubr.bf16.mxu0 0
  %229 = vmatmul.mubr.bf16.gmra.mrb[0].mxu0 %v83
  %v230 = vpop.f32.mrb[0].mxu0
  %v231 = vadd.f32 0.0, %v230
  %v232 = vpop.f32.mrb[0].mxu0
  %v233 = vpop.f32.mrb[0].mxu0
  %v234 = vadd.f32 0.0, %v233
  %v235 = vpop.f32.mrb[0].mxu0
  %236 = vdwg.mxu0
  %v237 = vpack.c.bf16 %v178, %v175
  %v238 = vpack.c.bf16 %v186, %v183
  %v239 = vpack.c.bf16 %v194, %v191
  %v240 = vpack.c.bf16 %v202, %v199
  %v241 = vpack.c.bf16 %v210, %v207
  %v242 = vpack.c.bf16 %v218, %v215
  %v243 = vpack.c.bf16 %v226, %v223
  %v244 = vpack.c.bf16 %v234, %v231
  %v253 = vunpack.c.l.b16 %v237
  %v254 = vunpack.c.h.b16 %v237
  %v255 = vunpack.c.l.b16 %v238
  %v256 = vunpack.c.h.b16 %v238
  %v257 = vunpack.c.l.b16 %v239
  %v258 = vunpack.c.h.b16 %v239
  %v259 = vunpack.c.l.b16 %v240
  %v260 = vunpack.c.h.b16 %v240
  %v261 = vunpack.c.l.b16 %v241
  %v262 = vunpack.c.h.b16 %v241
  %v263 = vunpack.c.l.b16 %v242
  %v264 = vunpack.c.h.b16 %v242
  %v265 = vunpack.c.l.b16 %v243
  %v266 = vunpack.c.h.b16 %v243
  %v267 = vunpack.c.l.b16 %v244
  %v268 = vunpack.c.h.b16 %v244
  %v269 = vpack.c.b16 %v253, %v253
  %v270 = vpack.c.b16 %v254, %v254
  %v271 = vpack.c.b16 %v255, %v255
  %v272 = vpack.c.b16 %v256, %v256
  %v273 = vpack.c.b16 %v257, %v257
  %v274 = vpack.c.b16 %v258, %v258
  %v275 = vpack.c.b16 %v259, %v259
  %v276 = vpack.c.b16 %v260, %v260
  %v277 = vpack.c.b16 %v261, %v261
  %v278 = vpack.c.b16 %v262, %v262
  %v279 = vpack.c.b16 %v263, %v263
  %v280 = vpack.c.b16 %v264, %v264
  %v281 = vpack.c.b16 %v265, %v265
  %v282 = vpack.c.b16 %v266, %v266
  %v283 = vpack.c.b16 %v267, %v267
  %v284 = vpack.c.b16 %v268, %v268
  %301 = vst [vmem:[%s2] sm:$0xf] %v269
  %302 = vst [vmem:[%s2 + $0x4] sm:$0xf] %v270
  %303 = vst [vmem:[%s2 + $0x8] sm:$0xf] %v271
  %304 = vst [vmem:[%s2 + $0xc] sm:$0xf] %v272
  %305 = vst [vmem:[%s2 + $0x10] sm:$0xf] %v273
  %306 = vst [vmem:[%s2 + $0x14] sm:$0xf] %v274
  %307 = vst [vmem:[%s2 + $0x18] sm:$0xf] %v275
  %308 = vst [vmem:[%s2 + $0x1c] sm:$0xf] %v276
  %309 = vst [vmem:[%s2 + $0x20] sm:$0xf] %v277
  %310 = vst [vmem:[%s2 + $0x24] sm:$0xf] %v278
  %311 = vst [vmem:[%s2 + $0x28] sm:$0xf] %v279
  %312 = vst [vmem:[%s2 + $0x2c] sm:$0xf] %v280
  %313 = vst [vmem:[%s2 + $0x30] sm:$0xf] %v281
  %314 = vst [vmem:[%s2 + $0x34] sm:$0xf] %v282
  %315 = vst [vmem:[%s2 + $0x38] sm:$0xf] %v283
  %316 = vst [vmem:[%s2 + $0x3c] sm:$0xf] %v284
  // Predicated region
  $region10: #{gnn_autoencoder_apply.3} parent=0 // pred_check
    _
  $region11: #{gnn_autoencoder_apply.3} parent=0 // pred_check_branch
    %318 = sbr.rel (0) target = $region13
  $region12: #{gnn_autoencoder_apply.3} parent=0 // pred_region
    _
  $region13: #{gnn_autoencoder_apply.3} parent=0 // pred_fallthru
    _
  // Predicated region
  $region14: #{gnn_autoencoder_apply.3} parent=0 // pred_check
    _
  $region15: #{gnn_autoencoder_apply.3} parent=0 // pred_check_branch
    %320 = sbr.rel (0) target = $region17
  $region16: #{gnn_autoencoder_apply.3} parent=0 // pred_region
    _
  $region17: #{gnn_autoencoder_apply.3} parent=0 // pred_fallthru
    _

// kernel: gnn_autoencoder_apply.5
$region0: #{gnn_autoencoder_apply.5}
  #allocation0 [shape = 'u32[]', space=smem, size = 0x4, offset = 0x4, fixed_abs, tag = 'smem constant byte address 0x4 - core index']
  #allocation1 [shape = 'u32[144,128]{1,0:T(1,128)}', space=vmem, size = 0x12000, scoped, tag = 'internal scratch']
  %s0 = inlined_call_operand.vmem [shape: bf16[128,128], index: 0, kind: input, shape index: {}]
  %s1 = inlined_call_operand.vmem [shape: bf16[128,128], index: 1, kind: input, shape index: {}]
  %s2 = inlined_call_operand.vmem [shape: f32[1,128], index: 2, kind: input, shape index: {}]
  %s3 = inlined_call_operand.vmem [shape: bf16[128,128], index: 3, kind: input, shape index: {}]
  %s4 = inlined_call_operand.vmem [shape: f32[1,128], index: 4, kind: input, shape index: {}]
  %s5 = inlined_call_operand.vmem [shape: f32[128,128], index: 5, kind: output, shape index: {}]
  %s6 = sld [smem:[#allocation0]]
  $region30: #{gnn_autoencoder_apply.5} parent=0
    _
  %s8 = ssub.s32 1, %s6
  %s9 = scalar_select 0, %s8, %s6
  // Predicated region
  $region2: #{gnn_autoencoder_apply.5} parent=0 // pred_check
    _
  $region3: #{gnn_autoencoder_apply.5} parent=0 // pred_check_branch
    %11 = sbr.rel (0) target = $region5
  $region4: #{gnn_autoencoder_apply.5} parent=0 // pred_region
    _
  $region5: #{gnn_autoencoder_apply.5} parent=0 // pred_fallthru
    _
  // Predicated region
  $region6: #{gnn_autoencoder_apply.5} parent=0 // pred_check
    _
  $region7: #{gnn_autoencoder_apply.5} parent=0 // pred_check_branch
    %13 = sbr.rel (0) target = $region9
  $region8: #{gnn_autoencoder_apply.5} parent=0 // pred_region
    _
  $region9: #{gnn_autoencoder_apply.5} parent=0 // pred_fallthru
    _
  // Predicated region
  $region10: #{gnn_autoencoder_apply.5} parent=0 // pred_check
    _
  $region11: #{gnn_autoencoder_apply.5} parent=0 // pred_check_branch
    %15 = sbr.rel (0) target = $region13
  $region12: #{gnn_autoencoder_apply.5} parent=0 // pred_region
    _
  $region13: #{gnn_autoencoder_apply.5} parent=0 // pred_fallthru
    _
  // Predicated region
  $region14: #{gnn_autoencoder_apply.5} parent=0 // pred_check
    _
  $region15: #{gnn_autoencoder_apply.5} parent=0 // pred_check_branch
    %17 = sbr.rel (0) target = $region17
  $region16: #{gnn_autoencoder_apply.5} parent=0 // pred_region
    _
  $region17: #{gnn_autoencoder_apply.5} parent=0 // pred_fallthru
    _
  // Predicated region
  $region18: #{gnn_autoencoder_apply.5} parent=0 // pred_check
    _
  $region19: #{gnn_autoencoder_apply.5} parent=0 // pred_check_branch
    %19 = sbr.rel (0) target = $region21
  $region20: #{gnn_autoencoder_apply.5} parent=0 // pred_region
    _
  $region21: #{gnn_autoencoder_apply.5} parent=0 // pred_fallthru
    _
  %v21 = vld [vmem:[%s0] sm:$0xf]
  %v22 = vld [vmem:[%s0 + $0x4] sm:$0xf]
  %v23 = vld [vmem:[%s0 + $0x8] sm:$0xf]
  %v24 = vld [vmem:[%s0 + $0xc] sm:$0xf]
  %v25 = vld [vmem:[%s0 + $0x10] sm:$0xf]
  %v26 = vld [vmem:[%s0 + $0x14] sm:$0xf]
  %v27 = vld [vmem:[%s0 + $0x18] sm:$0xf]
  %v28 = vld [vmem:[%s0 + $0x1c] sm:$0xf]
  %v29 = vld [vmem:[%s0 + $0x20] sm:$0xf]
  %v30 = vld [vmem:[%s0 + $0x24] sm:$0xf]
  %v31 = vld [vmem:[%s0 + $0x28] sm:$0xf]
  %v32 = vld [vmem:[%s0 + $0x2c] sm:$0xf]
  %v33 = vld [vmem:[%s0 + $0x30] sm:$0xf]
  %v34 = vld [vmem:[%s0 + $0x34] sm:$0xf]
  %v35 = vld [vmem:[%s0 + $0x38] sm:$0xf]
  %v36 = vld [vmem:[%s0 + $0x3c] sm:$0xf]
  %v37 = vld [vmem:[%s1] sm:$0xf]
  %v38 = vld [vmem:[%s1 + $0x4] sm:$0xf]
  %v39 = vld [vmem:[%s1 + $0x8] sm:$0xf]
  %v40 = vld [vmem:[%s1 + $0xc] sm:$0xf]
  %v41 = vld [vmem:[%s1 + $0x10] sm:$0xf]
  %v42 = vld [vmem:[%s1 + $0x14] sm:$0xf]
  %v43 = vld [vmem:[%s1 + $0x18] sm:$0xf]
  %v44 = vld [vmem:[%s1 + $0x1c] sm:$0xf]
  %v45 = vld [vmem:[%s1 + $0x20] sm:$0xf]
  %v46 = vld [vmem:[%s1 + $0x24] sm:$0xf]
  %v47 = vld [vmem:[%s1 + $0x28] sm:$0xf]
  %v48 = vld [vmem:[%s1 + $0x2c] sm:$0xf]
  %v49 = vld [vmem:[%s1 + $0x30] sm:$0xf]
  %v50 = vld [vmem:[%s1 + $0x34] sm:$0xf]
  %v51 = vld [vmem:[%s1 + $0x38] sm:$0xf]
  %v52 = vld [vmem:[%s1 + $0x3c] sm:$0xf]
  %v53 = vld [vmem:[%s2] sm:$0x1]
  %v55 = vlaneseq
  %v56 = vshrl.u32 %v55, 7
  %v57 = vsub.s32 0, %v56
  %v58 = vrot.slane %v53, %v57
  %v76 = vunpack.c.l.b16 %v21
  %v77 = vunpack.c.l.b16 %v22
  %v78 = vunpack.c.l.b16 %v23
  %v79 = vunpack.c.l.b16 %v24
  %v80 = vunpack.c.l.b16 %v25
  %v81 = vunpack.c.l.b16 %v26
  %v82 = vunpack.c.l.b16 %v27
  %v83 = vunpack.c.l.b16 %v28
  %v84 = vunpack.c.l.b16 %v29
  %v85 = vunpack.c.l.b16 %v30
  %v86 = vunpack.c.l.b16 %v31
  %v87 = vunpack.c.l.b16 %v32
  %v88 = vunpack.c.l.b16 %v33
  %v89 = vunpack.c.l.b16 %v34
  %v90 = vunpack.c.l.b16 %v35
  %v91 = vunpack.c.l.b16 %v36
  %v92 = vpack.c.b16 %v77, %v76
  %v93 = vpack.c.b16 %v79, %v78
  %v94 = vpack.c.b16 %v81, %v80
  %v95 = vpack.c.b16 %v83, %v82
  %v96 = vpack.c.b16 %v85, %v84
  %v97 = vpack.c.b16 %v87, %v86
  %v98 = vpack.c.b16 %v89, %v88
  %v99 = vpack.c.b16 %v91, %v90
  %v124 = vunpack.c.l.b16 %v37
  %v125 = vunpack.c.l.b16 %v38
  %v126 = vunpack.c.l.b16 %v39
  %v127 = vunpack.c.l.b16 %v40
  %v128 = vunpack.c.l.b16 %v41
  %v129 = vunpack.c.l.b16 %v42
  %v130 = vunpack.c.l.b16 %v43
  %v131 = vunpack.c.l.b16 %v44
  %v132 = vunpack.c.l.b16 %v45
  %v133 = vunpack.c.l.b16 %v46
  %v134 = vunpack.c.l.b16 %v47
  %v135 = vunpack.c.l.b16 %v48
  %v136 = vunpack.c.l.b16 %v49
  %v137 = vunpack.c.l.b16 %v50
  %v138 = vunpack.c.l.b16 %v51
  %v139 = vunpack.c.l.b16 %v52
  %v140 = vpack.c.b16 %v125, %v124
  %v141 = vpack.c.b16 %v127, %v126
  %v142 = vpack.c.b16 %v129, %v128
  %v143 = vpack.c.b16 %v131, %v130
  %v144 = vpack.c.b16 %v133, %v132
  %v145 = vpack.c.b16 %v135, %v134
  %v146 = vpack.c.b16 %v137, %v136
  %v147 = vpack.c.b16 %v139, %v138
  %156 = vmatprep.subr.bf16.mxu0 0
  %157 = vmatpush1.bf16.msra.mxu0 %v140
  %158 = vmatprep.subr.bf16.mxu0 0
  %159 = vmatpush1.bf16.msra.mxu0 %v141
  %160 = vmatprep.subr.bf16.mxu0 0
  %161 = vmatpush1.bf16.msra.mxu0 %v142
  %162 = vmatprep.subr.bf16.mxu0 0
  %163 = vmatpush1.bf16.msra.mxu0 %v143
  %164 = vmatprep.subr.bf16.mxu0 0
  %165 = vmatpush1.bf16.msra.mxu0 %v144
  %166 = vmatprep.subr.bf16.mxu0 0
  %167 = vmatpush1.bf16.msra.mxu0 %v145
  %168 = vmatprep.subr.bf16.mxu0 0
  %169 = vmatpush1.bf16.msra.mxu0 %v146
  %170 = vmatprep.subr.bf16.mxu0 0
  %171 = vmatpush1.bf16.msra.mxu0 %v147
  %172 = vmatprep.subr.bf16.mxu0 0
  %173 = vmatpush1.bf16.msra.mxu0 0
  %174 = vmatprep.subr.bf16.mxu0 0
  %175 = vmatpush1.bf16.msra.mxu0 0
  %176 = vmatprep.subr.bf16.mxu0 0
  %177 = vmatpush1.bf16.msra.mxu0 0
  %178 = vmatprep.subr.bf16.mxu0 0
  %179 = vmatpush1.bf16.msra.mxu0 0
  %180 = vmatprep.subr.bf16.mxu0 0
  %181 = vmatpush1.bf16.msra.mxu0 0
  %182 = vmatprep.subr.bf16.mxu0 0
  %183 = vmatpush1.bf16.msra.mxu0 0
  %184 = vmatprep.subr.bf16.mxu0 0
  %185 = vmatpush1.bf16.msra.mxu0 0
  %186 = vmatprep.subr.bf16.mxu0 0
  %187 = vmatpush1.bf16.msra.mxu0 0
  %188 = vmatprep.mubr.bf16.mxu0 0
  %189 = vmatmul.mubr.bf16.gmra.mrb[0].mxu0 %v92
  %v190 = vpop.f32.mrb[0].mxu0
  %v191 = vadd.f32 %v58, %v190
  %v192 = vpop.f32.mrb[0].mxu0
  %v193 = vpop.f32.mrb[0].mxu0
  %v194 = vadd.f32 %v58, %v193
  %v195 = vpop.f32.mrb[0].mxu0
  %196 = vmatprep.mubr.bf16.mxu0 0
  %197 = vmatmul.mubr.bf16.gmra.mrb[0].mxu0 %v93
  %v198 = vpop.f32.mrb[0].mxu0
  %v199 = vadd.f32 %v58, %v198
  %v200 = vpop.f32.mrb[0].mxu0
  %v201 = vpop.f32.mrb[0].mxu0
  %v202 = vadd.f32 %v58, %v201
  %v203 = vpop.f32.mrb[0].mxu0
  %204 = vmatprep.mubr.bf16.mxu0 0
  %205 = vmatmul.mubr.bf16.gmra.mrb[0].mxu0 %v94
  %v206 = vpop.f32.mrb[0].mxu0
  %v207 = vadd.f32 %v58, %v206
  %v208 = vpop.f32.mrb[0].mxu0
  %v209 = vpop.f32.mrb[0].mxu0
  %v210 = vadd.f32 %v58, %v209
  %v211 = vpop.f32.mrb[0].mxu0
  %212 = vmatprep.mubr.bf16.mxu0 0
  %213 = vmatmul.mubr.bf16.gmra.mrb[0].mxu0 %v95
  %v214 = vpop.f32.mrb[0].mxu0
  %v215 = vadd.f32 %v58, %v214
  %v216 = vpop.f32.mrb[0].mxu0
  %v217 = vpop.f32.mrb[0].mxu0
  %v218 = vadd.f32 %v58, %v217
  %v219 = vpop.f32.mrb[0].mxu0
  %220 = vmatprep.mubr.bf16.mxu0 0
  %221 = vmatmul.mubr.bf16.gmra.mrb[0].mxu0 %v96
  %v222 = vpop.f32.mrb[0].mxu0
  %v223 = vadd.f32 %v58, %v222
  %v224 = vpop.f32.mrb[0].mxu0
  %v225 = vpop.f32.mrb[0].mxu0
  %v226 = vadd.f32 %v58, %v225
  %v227 = vpop.f32.mrb[0].mxu0
  %228 = vmatprep.mubr.bf16.mxu0 0
  %229 = vmatmul.mubr.bf16.gmra.mrb[0].mxu0 %v97
  %v230 = vpop.f32.mrb[0].mxu0
  %v231 = vadd.f32 %v58, %v230
  %v232 = vpop.f32.mrb[0].mxu0
  %v233 = vpop.f32.mrb[0].mxu0
  %v234 = vadd.f32 %v58, %v233
  %v235 = vpop.f32.mrb[0].mxu0
  %236 = vmatprep.mubr.bf16.mxu0 0
  %237 = vmatmul.mubr.bf16.gmra.mrb[0].mxu0 %v98
  %v238 = vpop.f32.mrb[0].mxu0
  %v239 = vadd.f32 %v58, %v238
  %v240 = vpop.f32.mrb[0].mxu0
  %v241 = vpop.f32.mrb[0].mxu0
  %v242 = vadd.f32 %v58, %v241
  %v243 = vpop.f32.mrb[0].mxu0
  %244 = vmatprep.mubr.bf16.mxu0 0
  %245 = vmatmul.mubr.bf16.gmra.mrb[0].mxu0 %v99
  %v246 = vpop.f32.mrb[0].mxu0
  %v247 = vadd.f32 %v58, %v246
  %v248 = vpop.f32.mrb[0].mxu0
  %v249 = vpop.f32.mrb[0].mxu0
  %v250 = vadd.f32 %v58, %v249
  %v251 = vpop.f32.mrb[0].mxu0
  %252 = vdwg.mxu0
  %v253 = vpack.c.bf16 %v194, %v191
  %v254 = vpack.c.bf16 %v202, %v199
  %v255 = vpack.c.bf16 %v210, %v207
  %v256 = vpack.c.bf16 %v218, %v215
  %v257 = vpack.c.bf16 %v226, %v223
  %v258 = vpack.c.bf16 %v234, %v231
  %v259 = vpack.c.bf16 %v242, %v239
  %v260 = vpack.c.bf16 %v250, %v247
  %v261 = vld [vmem:[%s3] sm:$0xf]
  %v262 = vld [vmem:[%s3 + $0x4] sm:$0xf]
  %v263 = vld [vmem:[%s3 + $0x8] sm:$0xf]
  %v264 = vld [vmem:[%s3 + $0xc] sm:$0xf]
  %v265 = vld [vmem:[%s3 + $0x10] sm:$0xf]
  %v266 = vld [vmem:[%s3 + $0x14] sm:$0xf]
  %v267 = vld [vmem:[%s3 + $0x18] sm:$0xf]
  %v268 = vld [vmem:[%s3 + $0x1c] sm:$0xf]
  %v269 = vld [vmem:[%s3 + $0x20] sm:$0xf]
  %v270 = vld [vmem:[%s3 + $0x24] sm:$0xf]
  %v271 = vld [vmem:[%s3 + $0x28] sm:$0xf]
  %v272 = vld [vmem:[%s3 + $0x2c] sm:$0xf]
  %v273 = vld [vmem:[%s3 + $0x30] sm:$0xf]
  %v274 = vld [vmem:[%s3 + $0x34] sm:$0xf]
  %v275 = vld [vmem:[%s3 + $0x38] sm:$0xf]
  %v276 = vld [vmem:[%s3 + $0x3c] sm:$0xf]
  %v277 = vld [vmem:[%s4] sm:$0x1]
  %v279 = vlaneseq
  %v280 = vshrl.u32 %v279, 7
  %v281 = vsub.s32 0, %v280
  %v282 = vrot.slane %v277, %v281
  %v300 = vunpack.c.l.b16 %v261
  %v301 = vunpack.c.l.b16 %v262
  %v302 = vunpack.c.l.b16 %v263
  %v303 = vunpack.c.l.b16 %v264
  %v304 = vunpack.c.l.b16 %v265
  %v305 = vunpack.c.l.b16 %v266
  %v306 = vunpack.c.l.b16 %v267
  %v307 = vunpack.c.l.b16 %v268
  %v308 = vunpack.c.l.b16 %v269
  %v309 = vunpack.c.l.b16 %v270
  %v310 = vunpack.c.l.b16 %v271
  %v311 = vunpack.c.l.b16 %v272
  %v312 = vunpack.c.l.b16 %v273
  %v313 = vunpack.c.l.b16 %v274
  %v314 = vunpack.c.l.b16 %v275
  %v315 = vunpack.c.l.b16 %v276
  %v316 = vpack.c.b16 %v301, %v300
  %v317 = vpack.c.b16 %v303, %v302
  %v318 = vpack.c.b16 %v305, %v304
  %v319 = vpack.c.b16 %v307, %v306
  %v320 = vpack.c.b16 %v309, %v308
  %v321 = vpack.c.b16 %v311, %v310
  %v322 = vpack.c.b16 %v313, %v312
  %v323 = vpack.c.b16 %v315, %v314
  %332 = vmatprep.subr.bf16.mxu0 0
  %333 = vmatpush1.bf16.msra.mxu0 %v316
  %334 = vmatprep.subr.bf16.mxu0 0
  %335 = vmatpush1.bf16.msra.mxu0 %v317
  %336 = vmatprep.subr.bf16.mxu0 0
  %337 = vmatpush1.bf16.msra.mxu0 %v318
  %338 = vmatprep.subr.bf16.mxu0 0
  %339 = vmatpush1.bf16.msra.mxu0 %v319
  %340 = vmatprep.subr.bf16.mxu0 0
  %341 = vmatpush1.bf16.msra.mxu0 %v320
  %342 = vmatprep.subr.bf16.mxu0 0
  %343 = vmatpush1.bf16.msra.mxu0 %v321
  %344 = vmatprep.subr.bf16.mxu0 0
  %345 = vmatpush1.bf16.msra.mxu0 %v322
  %346 = vmatprep.subr.bf16.mxu0 0
  %347 = vmatpush1.bf16.msra.mxu0 %v323
  %348 = vmatprep.subr.bf16.mxu0 0
  %349 = vmatpush1.bf16.msra.mxu0 0
  %350 = vmatprep.subr.bf16.mxu0 0
  %351 = vmatpush1.bf16.msra.mxu0 0
  %352 = vmatprep.subr.bf16.mxu0 0
  %353 = vmatpush1.bf16.msra.mxu0 0
  %354 = vmatprep.subr.bf16.mxu0 0
  %355 = vmatpush1.bf16.msra.mxu0 0
  %356 = vmatprep.subr.bf16.mxu0 0
  %357 = vmatpush1.bf16.msra.mxu0 0
  %358 = vmatprep.subr.bf16.mxu0 0
  %359 = vmatpush1.bf16.msra.mxu0 0
  %360 = vmatprep.subr.bf16.mxu0 0
  %361 = vmatpush1.bf16.msra.mxu0 0
  %362 = vmatprep.subr.bf16.mxu0 0
  %363 = vmatpush1.bf16.msra.mxu0 0
  %364 = vmatprep.mubr.bf16.mxu0 0
  %365 = vmatmul.mubr.bf16.gmra.mrb[0].mxu0 %v253
  %v366 = vpop.f32.mrb[0].mxu0
  %v367 = vadd.f32 %v282, %v366
  %v368 = vpop.f32.mrb[0].mxu0
  %v369 = vpop.f32.mrb[0].mxu0
  %v370 = vadd.f32 %v282, %v369
  %v371 = vpop.f32.mrb[0].mxu0
  %372 = vmatprep.mubr.bf16.mxu0 0
  %373 = vmatmul.mubr.bf16.gmra.mrb[0].mxu0 %v254
  %v374 = vpop.f32.mrb[0].mxu0
  %v375 = vadd.f32 %v282, %v374
  %v376 = vpop.f32.mrb[0].mxu0
  %v377 = vpop.f32.mrb[0].mxu0
  %v378 = vadd.f32 %v282, %v377
  %v379 = vpop.f32.mrb[0].mxu0
  %380 = vmatprep.mubr.bf16.mxu0 0
  %381 = vmatmul.mubr.bf16.gmra.mrb[0].mxu0 %v255
  %v382 = vpop.f32.mrb[0].mxu0
  %v383 = vadd.f32 %v282, %v382
  %v384 = vpop.f32.mrb[0].mxu0
  %v385 = vpop.f32.mrb[0].mxu0
  %v386 = vadd.f32 %v282, %v385
  %v387 = vpop.f32.mrb[0].mxu0
  %388 = vmatprep.mubr.bf16.mxu0 0
  %389 = vmatmul.mubr.bf16.gmra.mrb[0].mxu0 %v256
  %v390 = vpop.f32.mrb[0].mxu0
  %v391 = vadd.f32 %v282, %v390
  %v392 = vpop.f32.mrb[0].mxu0
  %v393 = vpop.f32.mrb[0].mxu0
  %v394 = vadd.f32 %v282, %v393
  %v395 = vpop.f32.mrb[0].mxu0
  %396 = vmatprep.mubr.bf16.mxu0 0
  %397 = vmatmul.mubr.bf16.gmra.mrb[0].mxu0 %v257
  %v398 = vpop.f32.mrb[0].mxu0
  %v399 = vadd.f32 %v282, %v398
  %v400 = vpop.f32.mrb[0].mxu0
  %v401 = vpop.f32.mrb[0].mxu0
  %v402 = vadd.f32 %v282, %v401
  %v403 = vpop.f32.mrb[0].mxu0
  %404 = vmatprep.mubr.bf16.mxu0 0
  %405 = vmatmul.mubr.bf16.gmra.mrb[0].mxu0 %v258
  %v406 = vpop.f32.mrb[0].mxu0
  %v407 = vadd.f32 %v282, %v406
  %v408 = vpop.f32.mrb[0].mxu0
  %v409 = vpop.f32.mrb[0].mxu0
  %v410 = vadd.f32 %v282, %v409
  %v411 = vpop.f32.mrb[0].mxu0
  %412 = vmatprep.mubr.bf16.mxu0 0
  %413 = vmatmul.mubr.bf16.gmra.mrb[0].mxu0 %v259
  %v414 = vpop.f32.mrb[0].mxu0
  %v415 = vadd.f32 %v282, %v414
  %v416 = vpop.f32.mrb[0].mxu0
  %v417 = vpop.f32.mrb[0].mxu0
  %v418 = vadd.f32 %v282, %v417
  %v419 = vpop.f32.mrb[0].mxu0
  %420 = vmatprep.mubr.bf16.mxu0 0
  %421 = vmatmul.mubr.bf16.gmra.mrb[0].mxu0 %v260
  %v422 = vpop.f32.mrb[0].mxu0
  %v423 = vadd.f32 %v282, %v422
  %v424 = vpop.f32.mrb[0].mxu0
  %v425 = vpop.f32.mrb[0].mxu0
  %v426 = vadd.f32 %v282, %v425
  %v427 = vpop.f32.mrb[0].mxu0
  %428 = vdwg.mxu0
  %429 = vst [vmem:[%s5] sm:$0xff] %v367
  %430 = vst [vmem:[%s5 + $0x8] sm:$0xff] %v370
  %431 = vst [vmem:[%s5 + $0x10] sm:$0xff] %v375
  %432 = vst [vmem:[%s5 + $0x18] sm:$0xff] %v378
  %433 = vst [vmem:[%s5 + $0x20] sm:$0xff] %v383
  %434 = vst [vmem:[%s5 + $0x28] sm:$0xff] %v386
  %435 = vst [vmem:[%s5 + $0x30] sm:$0xff] %v391
  %436 = vst [vmem:[%s5 + $0x38] sm:$0xff] %v394
  %437 = vst [vmem:[%s5 + $0x40] sm:$0xff] %v399
  %438 = vst [vmem:[%s5 + $0x48] sm:$0xff] %v402
  %439 = vst [vmem:[%s5 + $0x50] sm:$0xff] %v407
  %440 = vst [vmem:[%s5 + $0x58] sm:$0xff] %v410
  %441 = vst [vmem:[%s5 + $0x60] sm:$0xff] %v415
  %442 = vst [vmem:[%s5 + $0x68] sm:$0xff] %v418
  %443 = vst [vmem:[%s5 + $0x70] sm:$0xff] %v423
  %444 = vst [vmem:[%s5 + $0x78] sm:$0xff] %v426
  // Predicated region
  $region22: #{gnn_autoencoder_apply.5} parent=0 // pred_check
    _
  $region23: #{gnn_autoencoder_apply.5} parent=0 // pred_check_branch
    %446 = sbr.rel (0) target = $region25
  $region24: #{gnn_autoencoder_apply.5} parent=0 // pred_region
    _
  $region25: #{gnn_autoencoder_apply.5} parent=0 // pred_fallthru
    _
  // Predicated region
  $region26: #{gnn_autoencoder_apply.5} parent=0 // pred_check
    _
  $region27: #{gnn_autoencoder_apply.5} parent=0 // pred_check_branch
    %448 = sbr.rel (0) target = $region29
  $region28: #{gnn_autoencoder_apply.5} parent=0 // pred_region
    _
  $region29: #{gnn_autoencoder_apply.5} parent=0 // pred_fallthru
    _

</llo_original>
